<compile_context>
chip_gen: v7x
topology: tpu7x:2x2x1
jax: 0.10.0
libtpu: 0.0.40
codegen_flags: <defaults>
</compile_context>

<pallas_src>
import jax
import jax.numpy as jnp
from jax.experimental import pallas as pl
from jax.experimental.pallas import tpu as pltpu


# ----------------------------------------------------------------------------
# Pallas kernel: fused 3x3 conv (pad=1) + bias + ReLU, whole batch in one step
# ----------------------------------------------------------------------------
def _conv3x3_relu_kernel(x_ref, r_ref, b_ref, o_ref):
    # x_ref: (N, H+2, (W+2)*C)     bf16  padded NHWC batch, lane-flattened
    # r_ref: (3, (W+2)*C, W*Cout)  bf16  banded conv weights (one band per dy)
    # b_ref: (1, W*Cout)           f32   bias tiled across W
    # o_ref: (N, H, W*Cout)        bf16  lane-dense output (dense 128-lane stores)
    n = x_ref.shape[0]
    h = o_ref.shape[1]
    wcout = o_ref.shape[2]

    bias = b_ref[...]                                      # (1, W*Cout) f32

    for ni in range(n):                                    # static unroll (N=2)
        acc = jnp.zeros((h, wcout), jnp.float32)
        for dy in range(3):                                # static unroll -> 3 MXU matmuls
            # 3x3 conv = sum over 3 row shifts of (rows @ banded column weight).
            win = x_ref[ni, dy:dy + h, :]                  # (H, (W+2)*C) bf16
            acc = acc + jnp.dot(win, r_ref[dy],
                                preferred_element_type=jnp.float32)
        acc = jnp.maximum(acc + bias, 0.0)                 # bias + ReLU in f32 (v5e-safe)
        o_ref[ni, :, :] = acc.astype(o_ref.dtype)          # dense bf16 store


def _conv3x3_relu_pallas(xp, r_band, bias_tiled, cin):
    n, hp, k = xp.shape                     # hp = H+2, k = (W+2)*C
    h = hp - 2
    wcout = r_band.shape[2]                 # W * Cout (128 -> lane-dense)

    # Useful conv FLOPs / bytes (advisory only; not the inflated banded FLOPs).
    flops = 2 * n * h * wcout * 9 * cin
    bytes_accessed = (xp.size * xp.dtype.itemsize
                      + r_band.size * r_band.dtype.itemsize
                      + bias_tiled.size * bias_tiled.dtype.itemsize
                      + n * h * wcout * 2)                 # bf16 output

    return pl.pallas_call(
        _conv3x3_relu_kernel,
        out_shape=jax.ShapeDtypeStruct((n, h, wcout), jnp.bfloat16),
        # Single grid step: whole batch fits trivially in VMEM, so per-step
        # overhead is paid exactly once (the old (2,2) grid was overhead-bound).
        grid=(1,),
        in_specs=[
            pl.BlockSpec((n, hp, k), lambda i: (0, 0, 0)),
            pl.BlockSpec(r_band.shape, lambda i: (0, 0, 0)),
            pl.BlockSpec(bias_tiled.shape, lambda i: (0, 0)),
        ],
        out_specs=pl.BlockSpec((n, h, wcout), lambda i: (0, 0, 0)),
        compiler_params=pltpu.CompilerParams(
            # One step -> nothing to shard across TensorCores; at detector
            # scale shard the (many-step) row-tile axis instead.
            dimension_semantics=("arbitrary",),
            vmem_limit_bytes=32 * 1024 * 1024,
        ),
        cost_estimate=pl.CostEstimate(flops=flops, transcendentals=0,
                                      bytes_accessed=bytes_accessed),
    )(xp, r_band, bias_tiled)


# ----------------------------------------------------------------------------
# Weight prep (hoisted out of the forward): banded conv weight + tiled bias
# ----------------------------------------------------------------------------
def _banded_weight(weight, w_out):
    """R[dy, x*C + c, w*Cout + co] = weight[co, c, dy, x - w] if 0 <= x-w < 3 else 0."""
    cout, c, kh, kw = weight.shape
    k4 = jnp.transpose(weight, (2, 3, 1, 0))                 # [dy, dx, c, co]
    x_idx = jnp.arange(w_out + 2)[:, None]                   # padded column x
    w_idx = jnp.arange(w_out)[None, :]                       # output column w
    dx = x_idx - w_idx                                       # [W+2, W]
    valid = (dx >= 0) & (dx < kw)
    band = k4[:, jnp.where(valid, dx, 0)]                    # [dy, x, w, c, co]
    band = band * valid[None, :, :, None, None].astype(k4.dtype)
    band = jnp.transpose(band, (0, 1, 3, 2, 4))              # [dy, x, c, w, co]
    return band.reshape(kh, (w_out + 2) * c, w_out * cout)


# ----------------------------------------------------------------------------
# Representative inner module: Conv2d(Cin, Cout, 3, padding=1) + ReLU
# ----------------------------------------------------------------------------
class InnerConvModule:
    """Deterministic stand-in for the wrapped detector: Conv2d(C->Cout,3,pad=1)+ReLU."""

    def __init__(self, cin, cout, key):
        kw_, kb_ = jax.random.split(key)
        fan_in = cin * 3 * 3
        bound = 1.0 / float(fan_in) ** 0.5
        self.weight = jax.random.uniform(
            kw_, (cout, cin, 3, 3), jnp.float32, -bound, bound)
        self.bias = jax.random.uniform(
            kb_, (cout,), jnp.float32, -bound, bound)
        self._prep_cache = {}   # per-width (banded weight, tiled bias); built once

    def _get_prep(self, w_out):
        if w_out not in self._prep_cache:
            r_band = _banded_weight(self.weight, w_out).astype(jnp.bfloat16)
            b_tiled = jnp.tile(self.bias, w_out)[None, :]     # [1, W*Cout], f32
            self._prep_cache[w_out] = (r_band, b_tiled)
        return self._prep_cache[w_out]

    def __call__(self, images, targets=None):
        # images: [N, C, H, W] (PyTorch NCHW); `targets` is accepted and unused.
        n, c, h, w = images.shape
        cout = self.bias.shape[0]

        # Only per-call prep: NCHW->NHWC, zero-pad for pad=1, bf16 cast,
        # flatten (W+2, C) into one lane axis.  No im2col blow-up in HBM.
        x = jnp.transpose(images, (0, 2, 3, 1))               # [N, H, W, C]
        x = jnp.pad(x, ((0, 0), (1, 1), (1, 1), (0, 0)))      # [N, H+2, W+2, C]
        xp = x.astype(jnp.bfloat16).reshape(n, h + 2, (w + 2) * c)

        r_band, b_tiled = self._get_prep(w)                   # cached at first use

        out = _conv3x3_relu_pallas(xp, r_band, b_tiled, c)    # [N, H, W*Cout] bf16
        # NHWC bf16 end-to-end (review: drop the NCHW transpose / f32 writeback).
        return out.reshape(n, h, w, cout)                     # free reshape


# ----------------------------------------------------------------------------
# WrappedModel: pure delegation, identical semantics to the PyTorch class
# ----------------------------------------------------------------------------
class WrappedModel:
    def __init__(self, module):
        self.module = module

    def __call__(self, images, targets=None):
        return self.module(images, targets)


# ----------------------------------------------------------------------------
# Plain-JAX reference for correctness checking
# ----------------------------------------------------------------------------
def _reference_conv_relu(images, weight, bias):
    out = jax.lax.conv_general_dilated(
        images, weight, window_strides=(1, 1), padding="SAME",
        dimension_numbers=("NCHW", "OIHW", "NCHW"))
    return jnp.maximum(out + bias[None, :, None, None], 0.0)


if __name__ == "__main__":
    key = jax.random.PRNGKey(0)
    k_img, k_mod = jax.random.split(key)

    # small shapes: batch=2, channels=4, spatial=16x16  (NCHW)
    images = jax.random.normal(k_img, (2, 4, 16, 16), jnp.float32)

    inner = InnerConvModule(cin=4, cout=8, key=k_mod)
    model = WrappedModel(inner)

    out = jax.block_until_ready(model(images, targets=None))

    # sanity: NHWC bf16 output of Conv2d(4->8, 3x3, pad=1) + ReLU
    assert out.shape == (2, 16, 16, 8), out.shape
    assert out.dtype == jnp.bfloat16, out.dtype
    assert bool(jnp.all(jnp.isfinite(out.astype(jnp.float32))))

    # numerics: fused bf16-MXU / f32-accumulate kernel vs. plain-JAX f32 conv
    ref = _reference_conv_relu(images, inner.weight, inner.bias)   # NCHW f32
    ref_nhwc = jnp.transpose(ref, (0, 2, 3, 1))
    err = float(jnp.max(jnp.abs(out.astype(jnp.float32) - ref_nhwc)))
    assert err < 6e-2, err

    print("KERNEL_OK")
</pallas_src>

<mosaic_0001>
module attributes {stable_mosaic.version = 11 : i64} {
  func.func @_conv3x3_relu_kernel(%arg0: i32, %arg1: memref<2x18x72xbf16, #tpu.memory_space<vmem>>, %arg2: memref<3x72x128xbf16, #tpu.memory_space<vmem>>, %arg3: memref<1x128xf32, #tpu.memory_space<vmem>>, %arg4: memref<2x16x128xbf16, #tpu.memory_space<vmem>>) attributes {dimension_semantics = [#tpu.dimension_semantics<arbitrary>], iteration_bounds = array<i64: 1>, scalar_prefetch = 0 : i64, scratch_operands = 0 : i64, tpu.core_type = #tpu.core_type<tc>, window_params = [{pipeline_mode = #tpu.pipeline_mode<synchronous>, transform_indices = @transform_0, window_bounds = array<i64: 2, 18, 72>}, {pipeline_mode = #tpu.pipeline_mode<synchronous>, transform_indices = @transform_1, window_bounds = array<i64: 3, 72, 128>}, {pipeline_mode = #tpu.pipeline_mode<synchronous>, transform_indices = @transform_2, window_bounds = array<i64: 1, 128>}, {pipeline_mode = #tpu.pipeline_mode<synchronous>, transform_indices = @transform_3, window_bounds = array<i64: 2, 16, 128>}]} {
    %c0 = arith.constant 0 : index
    %c0_0 = arith.constant 0 : index
    %0 = vector.load %arg3[%c0, %c0_0] : memref<1x128xf32, #tpu.memory_space<vmem>>, vector<1x128xf32>
    %cst = arith.constant 0.000000e+00 : f32
    %1 = vector.broadcast %cst : f32 to vector<16x128xf32>
    %c0_1 = arith.constant 0 : index
    %c0_2 = arith.constant 0 : index
    %c0_3 = arith.constant 0 : index
    %2 = vector.load %arg1[%c0_1, %c0_2, %c0_3] : memref<2x18x72xbf16, #tpu.memory_space<vmem>>, vector<1x16x72xbf16>
    %3 = vector.shape_cast %2 : vector<1x16x72xbf16> to vector<16x72xbf16>
    %c0_4 = arith.constant 0 : index
    %c0_5 = arith.constant 0 : index
    %c0_6 = arith.constant 0 : index
    %4 = vector.load %arg2[%c0_4, %c0_5, %c0_6] : memref<3x72x128xbf16, #tpu.memory_space<vmem>>, vector<1x72x128xbf16>
    %5 = vector.shape_cast %4 : vector<1x72x128xbf16> to vector<72x128xbf16>
    %cst_7 = arith.constant dense<0.000000e+00> : vector<16x128xf32>
    %6 = tpu.matmul %3, %5, %cst_7 {dimension_numbers = #tpu.dot_dimension_numbers<[1], [0], [0], [1], [0, 0, 1, 1], [], []>} : vector<16x72xbf16>, vector<72x128xbf16>, vector<16x128xf32> -> vector<16x128xf32>
    %7 = arith.addf %1, %6 : vector<16x128xf32>
    %c0_8 = arith.constant 0 : index
    %c1 = arith.constant 1 : index
    %c0_9 = arith.constant 0 : index
    %8 = vector.load %arg1[%c0_8, %c1, %c0_9] : memref<2x18x72xbf16, #tpu.memory_space<vmem>>, vector<1x16x72xbf16>
    %9 = vector.shape_cast %8 : vector<1x16x72xbf16> to vector<16x72xbf16>
    %c1_10 = arith.constant 1 : index
    %c0_11 = arith.constant 0 : index
    %c0_12 = arith.constant 0 : index
    %10 = vector.load %arg2[%c1_10, %c0_11, %c0_12] : memref<3x72x128xbf16, #tpu.memory_space<vmem>>, vector<1x72x128xbf16>
    %11 = vector.shape_cast %10 : vector<1x72x128xbf16> to vector<72x128xbf16>
    %cst_13 = arith.constant dense<0.000000e+00> : vector<16x128xf32>
    %12 = tpu.matmul %9, %11, %cst_13 {dimension_numbers = #tpu.dot_dimension_numbers<[1], [0], [0], [1], [0, 0, 1, 1], [], []>} : vector<16x72xbf16>, vector<72x128xbf16>, vector<16x128xf32> -> vector<16x128xf32>
    %13 = arith.addf %7, %12 : vector<16x128xf32>
    %c0_14 = arith.constant 0 : index
    %c2 = arith.constant 2 : index
    %c0_15 = arith.constant 0 : index
    %14 = vector.load %arg1[%c0_14, %c2, %c0_15] : memref<2x18x72xbf16, #tpu.memory_space<vmem>>, vector<1x16x72xbf16>
    %15 = vector.shape_cast %14 : vector<1x16x72xbf16> to vector<16x72xbf16>
    %c2_16 = arith.constant 2 : index
    %c0_17 = arith.constant 0 : index
    %c0_18 = arith.constant 0 : index
    %16 = vector.load %arg2[%c2_16, %c0_17, %c0_18] : memref<3x72x128xbf16, #tpu.memory_space<vmem>>, vector<1x72x128xbf16>
    %17 = vector.shape_cast %16 : vector<1x72x128xbf16> to vector<72x128xbf16>
    %cst_19 = arith.constant dense<0.000000e+00> : vector<16x128xf32>
    %18 = tpu.matmul %15, %17, %cst_19 {dimension_numbers = #tpu.dot_dimension_numbers<[1], [0], [0], [1], [0, 0, 1, 1], [], []>} : vector<16x72xbf16>, vector<72x128xbf16>, vector<16x128xf32> -> vector<16x128xf32>
    %19 = arith.addf %13, %18 : vector<16x128xf32>
    %20 = vector.broadcast %0 : vector<1x128xf32> to vector<16x128xf32>
    %21 = arith.addf %19, %20 : vector<16x128xf32>
    %cst_20 = arith.constant 0.000000e+00 : f32
    %22 = vector.broadcast %cst_20 : f32 to vector<16x128xf32>
    %23 = arith.maximumf %21, %22 : vector<16x128xf32>
    %24 = arith.truncf %23 : vector<16x128xf32> to vector<16x128xbf16>
    %c0_21 = arith.constant 0 : index
    %c0_22 = arith.constant 0 : index
    %c0_23 = arith.constant 0 : index
    %25 = vector.load %arg4[%c0_21, %c0_22, %c0_23] : memref<2x16x128xbf16, #tpu.memory_space<vmem>>, vector<1x16x128xbf16>
    %26 = vector.shape_cast %25 : vector<1x16x128xbf16> to vector<16x128xbf16>
    %27 = vector.shape_cast %24 : vector<16x128xbf16> to vector<1x16x128xbf16>
    tpu.vector_store %arg4[%c0_21, %c0_22, %c0_23], %27 {strides = array<i32>} : memref<2x16x128xbf16, #tpu.memory_space<vmem>>, vector<1x16x128xbf16>,
    %cst_24 = arith.constant 0.000000e+00 : f32
    %28 = vector.broadcast %cst_24 : f32 to vector<16x128xf32>
    %c1_25 = arith.constant 1 : index
    %c0_26 = arith.constant 0 : index
    %c0_27 = arith.constant 0 : index
    %29 = vector.load %arg1[%c1_25, %c0_26, %c0_27] : memref<2x18x72xbf16, #tpu.memory_space<vmem>>, vector<1x16x72xbf16>
    %30 = vector.shape_cast %29 : vector<1x16x72xbf16> to vector<16x72xbf16>
    %c0_28 = arith.constant 0 : index
    %c0_29 = arith.constant 0 : index
    %c0_30 = arith.constant 0 : index
    %31 = vector.load %arg2[%c0_28, %c0_29, %c0_30] : memref<3x72x128xbf16, #tpu.memory_space<vmem>>, vector<1x72x128xbf16>
    %32 = vector.shape_cast %31 : vector<1x72x128xbf16> to vector<72x128xbf16>
    %cst_31 = arith.constant dense<0.000000e+00> : vector<16x128xf32>
    %33 = tpu.matmul %30, %32, %cst_31 {dimension_numbers = #tpu.dot_dimension_numbers<[1], [0], [0], [1], [0, 0, 1, 1], [], []>} : vector<16x72xbf16>, vector<72x128xbf16>, vector<16x128xf32> -> vector<16x128xf32>
    %34 = arith.addf %28, %33 : vector<16x128xf32>
    %c1_32 = arith.constant 1 : index
    %c1_33 = arith.constant 1 : index
    %c0_34 = arith.constant 0 : index
    %35 = vector.load %arg1[%c1_32, %c1_33, %c0_34] : memref<2x18x72xbf16, #tpu.memory_space<vmem>>, vector<1x16x72xbf16>
    %36 = vector.shape_cast %35 : vector<1x16x72xbf16> to vector<16x72xbf16>
    %c1_35 = arith.constant 1 : index
    %c0_36 = arith.constant 0 : index
    %c0_37 = arith.constant 0 : index
    %37 = vector.load %arg2[%c1_35, %c0_36, %c0_37] : memref<3x72x128xbf16, #tpu.memory_space<vmem>>, vector<1x72x128xbf16>
    %38 = vector.shape_cast %37 : vector<1x72x128xbf16> to vector<72x128xbf16>
    %cst_38 = arith.constant dense<0.000000e+00> : vector<16x128xf32>
    %39 = tpu.matmul %36, %38, %cst_38 {dimension_numbers = #tpu.dot_dimension_numbers<[1], [0], [0], [1], [0, 0, 1, 1], [], []>} : vector<16x72xbf16>, vector<72x128xbf16>, vector<16x128xf32> -> vector<16x128xf32>
    %40 = arith.addf %34, %39 : vector<16x128xf32>
    %c1_39 = arith.constant 1 : index
    %c2_40 = arith.constant 2 : index
    %c0_41 = arith.constant 0 : index
    %41 = vector.load %arg1[%c1_39, %c2_40, %c0_41] : memref<2x18x72xbf16, #tpu.memory_space<vmem>>, vector<1x16x72xbf16>
    %42 = vector.shape_cast %41 : vector<1x16x72xbf16> to vector<16x72xbf16>
    %c2_42 = arith.constant 2 : index
    %c0_43 = arith.constant 0 : index
    %c0_44 = arith.constant 0 : index
    %43 = vector.load %arg2[%c2_42, %c0_43, %c0_44] : memref<3x72x128xbf16, #tpu.memory_space<vmem>>, vector<1x72x128xbf16>
    %44 = vector.shape_cast %43 : vector<1x72x128xbf16> to vector<72x128xbf16>
    %cst_45 = arith.constant dense<0.000000e+00> : vector<16x128xf32>
    %45 = tpu.matmul %42, %44, %cst_45 {dimension_numbers = #tpu.dot_dimension_numbers<[1], [0], [0], [1], [0, 0, 1, 1], [], []>} : vector<16x72xbf16>, vector<72x128xbf16>, vector<16x128xf32> -> vector<16x128xf32>
    %46 = arith.addf %40, %45 : vector<16x128xf32>
    %47 = vector.broadcast %0 : vector<1x128xf32> to vector<16x128xf32>
    %48 = arith.addf %46, %47 : vector<16x128xf32>
    %cst_46 = arith.constant 0.000000e+00 : f32
    %49 = vector.broadcast %cst_46 : f32 to vector<16x128xf32>
    %50 = arith.maximumf %48, %49 : vector<16x128xf32>
    %51 = arith.truncf %50 : vector<16x128xf32> to vector<16x128xbf16>
    %c1_47 = arith.constant 1 : index
    %c0_48 = arith.constant 0 : index
    %c0_49 = arith.constant 0 : index
    %52 = vector.load %arg4[%c1_47, %c0_48, %c0_49] : memref<2x16x128xbf16, #tpu.memory_space<vmem>>, vector<1x16x128xbf16>
    %53 = vector.shape_cast %52 : vector<1x16x128xbf16> to vector<16x128xbf16>
    %54 = vector.shape_cast %51 : vector<16x128xbf16> to vector<1x16x128xbf16>
    tpu.vector_store %arg4[%c1_47, %c0_48, %c0_49], %54 {strides = array<i32>} : memref<2x16x128xbf16, #tpu.memory_space<vmem>>, vector<1x16x128xbf16>,
    return
  }
  func.func @transform_0(%arg0: i32) -> (i32, i32, i32) {
    %c0_i32 = arith.constant 0 : i32
    %c0_i32_0 = arith.constant 0 : i32
    %c0_i32_1 = arith.constant 0 : i32
    %c0_i32_2 = arith.constant 0 : i32
    return %c0_i32, %c0_i32_0, %c0_i32_1 : i32, i32, i32
  }
  func.func @transform_1(%arg0: i32) -> (i32, i32, i32) {
    %c0_i32 = arith.constant 0 : i32
    %c0_i32_0 = arith.constant 0 : i32
    %c0_i32_1 = arith.constant 0 : i32
    %c0_i32_2 = arith.constant 0 : i32
    return %c0_i32, %c0_i32_0, %c0_i32_1 : i32, i32, i32
  }
  func.func @transform_2(%arg0: i32) -> (i32, i32) {
    %c0_i32 = arith.constant 0 : i32
    %c0_i32_0 = arith.constant 0 : i32
    %c0_i32_1 = arith.constant 0 : i32
    return %c0_i32, %c0_i32_0 : i32, i32
  }
  func.func @transform_3(%arg0: i32) -> (i32, i32, i32) {
    %c0_i32 = arith.constant 0 : i32
    %c0_i32_0 = arith.constant 0 : i32
    %c0_i32_1 = arith.constant 0 : i32
    %c0_i32_2 = arith.constant 0 : i32
    return %c0_i32, %c0_i32_0, %c0_i32_1 : i32, i32, i32
  }
}

</mosaic_0001>

<llo_original>
// kernel: tpu_custom_call.1
$region0: #{tpu_custom_call.1}
  #allocation0 [shape = 'u32[]', space=smem, size = 0x4, offset = 0x4, fixed_abs, tag = 'smem constant byte address 0x4 - core index']
  #allocation1 [shape = 'u32[144,128]{1,0:T(1,128)}', space=vmem, size = 0x12000, scoped, tag = 'internal scratch']
  %s0 = inlined_call_operand.vmem [shape: bf16[2,18,72], index: 0, kind: input, shape index: {}]
  %s1 = inlined_call_operand.hbm [shape: bf16[3,72,128], index: 1, kind: input, shape index: {}]
  %s2 = inlined_call_operand.vmem [shape: f32[1,128], index: 2, kind: input, shape index: {}]
  %s3 = inlined_call_operand.hbm [shape: bf16[2,16,128], index: 3, kind: output, shape index: {}]
  %s4 = sld [smem:[#allocation0]]
  $region26: #{tpu_custom_call.1} parent=0
    _
  %s6 = ssub.s32 1, %s4
  %s7 = scalar_select 0, %s6, %s4
  $region1: #{tpu_custom_call.1} parent=0
    #allocation2 [shape = 'u8[55296]{0}', space=vmem, size = 0xd800, scoped, tag = 'input window, operand 1, single buffered']
    #allocation3 [shape = 's32[1]{0}', space=sflag, size = 0x4, scoped, tag = 'scoped memory for tpu_custom_call.1']
    #allocation4 [shape = 's32[1]{0}', space=sflag, size = 0x4, scoped, tag = 'scoped memory for tpu_custom_call.1']
    #allocation5 [shape = 'u8[8192]{0}', space=vmem, size = 0x2000, scoped, tag = 'output window, operand 0, single buffered']
    %8 = vsyncpa [#allocation3], 0
    %9 = vsyncpa [#allocation4], 0
    // Predicated region
    $region2: #{tpu_custom_call.1} parent=1 // pred_check
      _
    $region3: #{tpu_custom_call.1} parent=1 // pred_check_branch
      %11 = sbr.rel (0) target = $region5
    $region4: #{tpu_custom_call.1} parent=1 // pred_region
      _
    $region5: #{tpu_custom_call.1} parent=1 // pred_fallthru
      _
    // Predicated region
    $region6: #{tpu_custom_call.1} parent=1 // pred_check
      _
    $region7: #{tpu_custom_call.1} parent=1 // pred_check_branch
      %13 = sbr.rel (0) target = $region9
    $region8: #{tpu_custom_call.1} parent=1 // pred_region
      %s15 = ssub.s32 1728, 1728
      %16 = vsyncadd [#allocation3], %s15
      %s17 = sshll.u32 [#allocation2], 4
      %s18 = int_to_ptr.vmem [resolvable:$true] %s17
      %23 = dma.hbm_to_vmem [thread:$0]  %s1, 1728, %s18, [#allocation3], 64, 64, 4
    $region9: #{tpu_custom_call.1} parent=1 // pred_fallthru
      _
    // Predicated region
    $region10: #{tpu_custom_call.1} parent=1 // pred_check
      _
    $region11: #{tpu_custom_call.1} parent=1 // pred_check_branch
      %25 = sbr.rel (0) target = $region13
    $region12: #{tpu_custom_call.1} parent=1 // pred_region
      _
    $region13: #{tpu_custom_call.1} parent=1 // pred_fallthru
      _
    // Predicated region
    $region14: #{tpu_custom_call.1} parent=1 // pred_check
      _
    $region15: #{tpu_custom_call.1} parent=1 // pred_check_branch
      %27 = sbr.rel (0) target = $region17
    $region16: #{tpu_custom_call.1} parent=1 // pred_region
      %28 = dma.done [#allocation3], 1728
    $region17: #{tpu_custom_call.1} parent=1 // pred_fallthru
      _
    %v30 = vld [vmem:[%s2] sm:$0x1]
    %v31 = vld [vmem:[%s0] sm:$0xf]
    %v32 = vld [vmem:[%s0 + $0x4] sm:$0xf]
    %v33 = vld [vmem:[#allocation2] sm:$0xf]
    %v34 = vld [vmem:[#allocation2 + $0x4] sm:$0xf]
    %v35 = vld [vmem:[#allocation2 + $0x8] sm:$0xf]
    %v36 = vld [vmem:[#allocation2 + $0xc] sm:$0xf]
    %v37 = vld [vmem:[#allocation2 + $0x10] sm:$0xf]
    %v38 = vld [vmem:[#allocation2 + $0x14] sm:$0xf]
    %v39 = vld [vmem:[#allocation2 + $0x18] sm:$0xf]
    %v40 = vld [vmem:[#allocation2 + $0x1c] sm:$0xf]
    %v41 = vld [vmem:[#allocation2 + $0x20] sm:$0xf]
    %v42 = vld [vmem:[%s0 + $0x8] sm:$0x1]
    %s43 = scalar_lea.vmem [#allocation2], 36
    %v44 = vld [vmem:[%s43] sm:$0xf]
    %v45 = vld [vmem:[%s43 + $0x4] sm:$0xf]
    %v46 = vld [vmem:[%s43 + $0x8] sm:$0xf]
    %v47 = vld [vmem:[%s43 + $0xc] sm:$0xf]
    %v48 = vld [vmem:[%s43 + $0x10] sm:$0xf]
    %v49 = vld [vmem:[%s43 + $0x14] sm:$0xf]
    %v50 = vld [vmem:[%s43 + $0x18] sm:$0xf]
    %v51 = vld [vmem:[%s43 + $0x1c] sm:$0xf]
    %v52 = vld [vmem:[%s43 + $0x20] sm:$0xf]
    %v56 = vunpack.c.l.b16 %v31
    %v57 = vunpack.c.l.b16 %v32
    %v58 = vunpack.c.l.b16 %v42
    %v59 = vpack.c.b16 %v57, %v56
    %v60 = vpack.c.b16 %v58, %v58
    %vm61 = vsmask.f32 7424
    %v63 = vshrl.u32 %v59, 16
    %v65 = vshll.u32 %v59, 16
    %v67 = vrot.slane %v65, 1
    %v68 = vor.u32 %v63, %v67
    %v70 = vshll.u32 %v60, 16
    %v72 = vrot.slane %v70, 1
    %v73 = vsel %vm61, %v68, %v72
    %v83 = vunpack.c.l.b16 %v44
    %v84 = vunpack.c.l.b16 %v45
    %v85 = vunpack.c.l.b16 %v46
    %v86 = vunpack.c.l.b16 %v47
    %v87 = vunpack.c.l.b16 %v48
    %v88 = vunpack.c.l.b16 %v49
    %v89 = vunpack.c.l.b16 %v50
    %v90 = vunpack.c.l.b16 %v51
    %v91 = vunpack.c.l.b16 %v52
    %v92 = vpack.c.b16 %v84, %v83
    %v93 = vpack.c.b16 %v86, %v85
    %v94 = vpack.c.b16 %v88, %v87
    %v95 = vpack.c.b16 %v90, %v89
    %v96 = vpack.c.b16 %v91, %v91
    %vm101 = vcmask 588800
    %v103 = vsel %vm101, %v73, 0
    %vm105 = vcmask 1043456
    %v107 = vsel %vm105, %v96, 0
    %109 = vmatprep.subr.bf16.mxu0 0
    %110 = vmatpush1.bf16.msra.mxu0 %v92
    %111 = vmatprep.subr.bf16.mxu0 0
    %112 = vmatpush1.bf16.msra.mxu0 %v93
    %113 = vmatprep.subr.bf16.mxu0 0
    %114 = vmatpush1.bf16.msra.mxu0 %v94
    %115 = vmatprep.subr.bf16.mxu0 0
    %116 = vmatpush1.bf16.msra.mxu0 %v95
    %117 = vmatprep.subr.bf16.mxu0 0
    %118 = vmatpush1.bf16.msra.mxu0 %v107
    %119 = vmatprep.subr.bf16.mxu0 0
    %120 = vmatpush1.bf16.msra.mxu0 0
    %121 = vmatprep.subr.bf16.mxu0 0
    %122 = vmatpush1.bf16.msra.mxu0 0
    %123 = vmatprep.subr.bf16.mxu0 0
    %124 = vmatpush1.bf16.msra.mxu0 0
    %125 = vmatprep.subr.bf16.mxu0 0
    %126 = vmatpush1.bf16.msra.mxu0 0
    %127 = vmatprep.subr.bf16.mxu0 0
    %128 = vmatpush1.bf16.msra.mxu0 0
    %129 = vmatprep.subr.bf16.mxu0 0
    %130 = vmatpush1.bf16.msra.mxu0 0
    %131 = vmatprep.subr.bf16.mxu0 0
    %132 = vmatpush1.bf16.msra.mxu0 0
    %133 = vmatprep.subr.bf16.mxu0 0
    %134 = vmatpush1.bf16.msra.mxu0 0
    %135 = vmatprep.subr.bf16.mxu0 0
    %136 = vmatpush1.bf16.msra.mxu0 0
    %137 = vmatprep.subr.bf16.mxu0 0
    %138 = vmatpush1.bf16.msra.mxu0 0
    %139 = vmatprep.subr.bf16.mxu0 0
    %140 = vmatpush1.bf16.msra.mxu0 0
    %141 = vmatprep.mubr.bf16.mxu0 0
    %142 = vmatmul.mubr.bf16.gmra.mrb[0].mxu0 %v103
    %v143 = vpop.f32.mrb[0].mxu0
    %v144 = vadd.f32 0.0, %v143
    %v145 = vpop.f32.mrb[0].mxu0
    %v146 = vpop.f32.mrb[0].mxu0
    %v147 = vadd.f32 0.0, %v146
    %v148 = vpop.f32.mrb[0].mxu0
    %149 = vdwg.mxu0
    %v159 = vunpack.c.l.b16 %v33
    %v160 = vunpack.c.l.b16 %v34
    %v161 = vunpack.c.l.b16 %v35
    %v162 = vunpack.c.l.b16 %v36
    %v163 = vunpack.c.l.b16 %v37
    %v164 = vunpack.c.l.b16 %v38
    %v165 = vunpack.c.l.b16 %v39
    %v166 = vunpack.c.l.b16 %v40
    %v167 = vunpack.c.l.b16 %v41
    %v168 = vpack.c.b16 %v160, %v159
    %v169 = vpack.c.b16 %v162, %v161
    %v170 = vpack.c.b16 %v164, %v163
    %v171 = vpack.c.b16 %v166, %v165
    %v172 = vpack.c.b16 %v167, %v167
    %v177 = vsel %vm101, %v59, 0
    %v180 = vsel %vm105, %v172, 0
    %182 = vmatprep.subr.bf16.mxu0 0
    %183 = vmatpush1.bf16.msra.mxu0 %v168
    %184 = vmatprep.subr.bf16.mxu0 0
    %185 = vmatpush1.bf16.msra.mxu0 %v169
    %186 = vmatprep.subr.bf16.mxu0 0
    %187 = vmatpush1.bf16.msra.mxu0 %v170
    %188 = vmatprep.subr.bf16.mxu0 0
    %189 = vmatpush1.bf16.msra.mxu0 %v171
    %190 = vmatprep.subr.bf16.mxu0 0
    %191 = vmatpush1.bf16.msra.mxu0 %v180
    %192 = vmatprep.subr.bf16.mxu0 0
    %193 = vmatpush1.bf16.msra.mxu0 0
    %194 = vmatprep.subr.bf16.mxu0 0
    %195 = vmatpush1.bf16.msra.mxu0 0
    %196 = vmatprep.subr.bf16.mxu0 0
    %197 = vmatpush1.bf16.msra.mxu0 0
    %198 = vmatprep.subr.bf16.mxu0 0
    %199 = vmatpush1.bf16.msra.mxu0 0
    %200 = vmatprep.subr.bf16.mxu0 0
    %201 = vmatpush1.bf16.msra.mxu0 0
    %202 = vmatprep.subr.bf16.mxu0 0
    %203 = vmatpush1.bf16.msra.mxu0 0
    %204 = vmatprep.subr.bf16.mxu0 0
    %205 = vmatpush1.bf16.msra.mxu0 0
    %206 = vmatprep.subr.bf16.mxu0 0
    %207 = vmatpush1.bf16.msra.mxu0 0
    %208 = vmatprep.subr.bf16.mxu0 0
    %209 = vmatpush1.bf16.msra.mxu0 0
    %210 = vmatprep.subr.bf16.mxu0 0
    %211 = vmatpush1.bf16.msra.mxu0 0
    %212 = vmatprep.subr.bf16.mxu0 0
    %213 = vmatpush1.bf16.msra.mxu0 0
    %214 = vmatprep.mubr.bf16.mxu0 0
    %215 = vmatmul.mubr.bf16.gmra.mrb[0].mxu0 %v177
    %v216 = vpop.f32.mrb[0].mxu0
    %v217 = vadd.f32 %v144, %v216
    %v218 = vpop.f32.mrb[0].mxu0
    %v219 = vpop.f32.mrb[0].mxu0
    %v220 = vadd.f32 %v147, %v219
    %v221 = vpop.f32.mrb[0].mxu0
    %222 = vdwg.mxu0
    %v223 = vld [vmem:[%s0] sm:$0xe]
    %s224 = scalar_lea.vmem [#allocation2], 72
    %v225 = vld [vmem:[%s224] sm:$0xf]
    %v226 = vld [vmem:[%s224 + $0x4] sm:$0xf]
    %v227 = vld [vmem:[%s224 + $0x8] sm:$0xf]
    %v228 = vld [vmem:[%s224 + $0xc] sm:$0xf]
    %v229 = vld [vmem:[%s224 + $0x10] sm:$0xf]
    %v230 = vld [vmem:[%s224 + $0x14] sm:$0xf]
    %v231 = vld [vmem:[%s224 + $0x18] sm:$0xf]
    %v232 = vld [vmem:[%s224 + $0x1c] sm:$0xf]
    %v233 = vld [vmem:[%s224 + $0x20] sm:$0xf]
    %v235 = vunpack.c.l.b16 %v223
    %v236 = vpack.c.b16 %v57, %v235
    %vm237 = vcmask 1046528
    %v238 = vrot.slane %v236, 1
    %v239 = vrot.slane %v60, 1
    %v240 = vsel %vm237, %v238, %v239
    %v250 = vunpack.c.l.b16 %v225
    %v251 = vunpack.c.l.b16 %v226
    %v252 = vunpack.c.l.b16 %v227
    %v253 = vunpack.c.l.b16 %v228
    %v254 = vunpack.c.l.b16 %v229
    %v255 = vunpack.c.l.b16 %v230
    %v256 = vunpack.c.l.b16 %v231
    %v257 = vunpack.c.l.b16 %v232
    %v258 = vunpack.c.l.b16 %v233
    %v259 = vpack.c.b16 %v251, %v250
    %v260 = vpack.c.b16 %v253, %v252
    %v261 = vpack.c.b16 %v255, %v254
    %v262 = vpack.c.b16 %v257, %v256
    %v263 = vpack.c.b16 %v258, %v258
    %v269 = vsel %vm101, %v240, 0
    %v272 = vsel %vm105, %v263, 0
    %274 = vmatprep.subr.bf16.mxu0 0
    %275 = vmatpush1.bf16.msra.mxu0 %v259
    %276 = vmatprep.subr.bf16.mxu0 0
    %277 = vmatpush1.bf16.msra.mxu0 %v260
    %278 = vmatprep.subr.bf16.mxu0 0
    %279 = vmatpush1.bf16.msra.mxu0 %v261
    %280 = vmatprep.subr.bf16.mxu0 0
    %281 = vmatpush1.bf16.msra.mxu0 %v262
    %282 = vmatprep.subr.bf16.mxu0 0
    %283 = vmatpush1.bf16.msra.mxu0 %v272
    %284 = vmatprep.subr.bf16.mxu0 0
    %285 = vmatpush1.bf16.msra.mxu0 0
    %286 = vmatprep.subr.bf16.mxu0 0
    %287 = vmatpush1.bf16.msra.mxu0 0
    %288 = vmatprep.subr.bf16.mxu0 0
    %289 = vmatpush1.bf16.msra.mxu0 0
    %290 = vmatprep.subr.bf16.mxu0 0
    %291 = vmatpush1.bf16.msra.mxu0 0
    %292 = vmatprep.subr.bf16.mxu0 0
    %293 = vmatpush1.bf16.msra.mxu0 0
    %294 = vmatprep.subr.bf16.mxu0 0
    %295 = vmatpush1.bf16.msra.mxu0 0
    %296 = vmatprep.subr.bf16.mxu0 0
    %297 = vmatpush1.bf16.msra.mxu0 0
    %298 = vmatprep.subr.bf16.mxu0 0
    %299 = vmatpush1.bf16.msra.mxu0 0
    %300 = vmatprep.subr.bf16.mxu0 0
    %301 = vmatpush1.bf16.msra.mxu0 0
    %302 = vmatprep.subr.bf16.mxu0 0
    %303 = vmatpush1.bf16.msra.mxu0 0
    %304 = vmatprep.subr.bf16.mxu0 0
    %305 = vmatpush1.bf16.msra.mxu0 0
    %306 = vmatprep.mubr.bf16.mxu0 0
    %307 = vmatmul.mubr.bf16.gmra.mrb[0].mxu0 %v269
    %v308 = vpop.f32.mrb[0].mxu0
    %v309 = vadd.f32 0.0, %v308
    %v310 = vpop.f32.mrb[0].mxu0
    %v311 = vpop.f32.mrb[0].mxu0
    %v312 = vadd.f32 0.0, %v311
    %v313 = vpop.f32.mrb[0].mxu0
    %314 = vdwg.mxu0
    %v315 = vadd.f32 %v217, %v309
    %v316 = vadd.f32 %v220, %v312
    %v318 = vlaneseq
    %v319 = vshrl.u32 %v318, 7
    %v320 = vsub.s32 0, %v319
    %v321 = vrot.slane %v30, %v320
    %v323 = vadd.f32 %v315, %v321
    %v324 = vadd.f32 %v316, %v321
    %v325 = vmax.f32 %v323, 0.0
    %v326 = vmax.f32 %v324, 0.0
    %v327 = vpack.c.bf16 %v326, %v325
    %v329 = vunpack.c.l.b16 %v327
    %v330 = vunpack.c.h.b16 %v327
    %v331 = vpack.c.b16 %v329, %v329
    %v332 = vpack.c.b16 %v330, %v330
    %335 = vst [vmem:[#allocation5] sm:$0xf] %v331
    %336 = vst [vmem:[#allocation5 + $0x4] sm:$0xf] %v332
    %s337 = scalar_lea.vmem %s0, 12
    %v338 = vld [vmem:[%s337] sm:$0xf]
    %v339 = vld [vmem:[%s337 + $0x4] sm:$0xf]
    %v340 = vld [vmem:[#allocation2] sm:$0xf]
    %v341 = vld [vmem:[#allocation2 + $0x4] sm:$0xf]
    %v342 = vld [vmem:[#allocation2 + $0x8] sm:$0xf]
    %v343 = vld [vmem:[#allocation2 + $0xc] sm:$0xf]
    %v344 = vld [vmem:[#allocation2 + $0x10] sm:$0xf]
    %v345 = vld [vmem:[#allocation2 + $0x14] sm:$0xf]
    %v346 = vld [vmem:[#allocation2 + $0x18] sm:$0xf]
    %v347 = vld [vmem:[#allocation2 + $0x1c] sm:$0xf]
    %v348 = vld [vmem:[#allocation2 + $0x20] sm:$0xf]
    %v349 = vld [vmem:[%s337 + $0x8] sm:$0x1]
    %v350 = vld [vmem:[%s43] sm:$0xf]
    %v351 = vld [vmem:[%s43 + $0x4] sm:$0xf]
    %v352 = vld [vmem:[%s43 + $0x8] sm:$0xf]
    %v353 = vld [vmem:[%s43 + $0xc] sm:$0xf]
    %v354 = vld [vmem:[%s43 + $0x10] sm:$0xf]
    %v355 = vld [vmem:[%s43 + $0x14] sm:$0xf]
    %v356 = vld [vmem:[%s43 + $0x18] sm:$0xf]
    %v357 = vld [vmem:[%s43 + $0x1c] sm:$0xf]
    %v358 = vld [vmem:[%s43 + $0x20] sm:$0xf]
    %v362 = vunpack.c.l.b16 %v338
    %v363 = vunpack.c.l.b16 %v339
    %v364 = vunpack.c.l.b16 %v349
    %v365 = vpack.c.b16 %v363, %v362
    %v366 = vpack.c.b16 %v364, %v364
    %v368 = vshrl.u32 %v365, 16
    %v370 = vshll.u32 %v365, 16
    %v372 = vrot.slane %v370, 1
    %v373 = vor.u32 %v368, %v372
    %v375 = vshll.u32 %v366, 16
    %v377 = vrot.slane %v375, 1
    %v378 = vsel %vm61, %v373, %v377
    %v388 = vunpack.c.l.b16 %v350
    %v389 = vunpack.c.l.b16 %v351
    %v390 = vunpack.c.l.b16 %v352
    %v391 = vunpack.c.l.b16 %v353
    %v392 = vunpack.c.l.b16 %v354
    %v393 = vunpack.c.l.b16 %v355
    %v394 = vunpack.c.l.b16 %v356
    %v395 = vunpack.c.l.b16 %v357
    %v396 = vunpack.c.l.b16 %v358
    %v397 = vpack.c.b16 %v389, %v388
    %v398 = vpack.c.b16 %v391, %v390
    %v399 = vpack.c.b16 %v393, %v392
    %v400 = vpack.c.b16 %v395, %v394
    %v401 = vpack.c.b16 %v396, %v396
    %v407 = vsel %vm101, %v378, 0
    %v410 = vsel %vm105, %v401, 0
    %412 = vmatprep.subr.bf16.mxu0 0
    %413 = vmatpush1.bf16.msra.mxu0 %v397
    %414 = vmatprep.subr.bf16.mxu0 0
    %415 = vmatpush1.bf16.msra.mxu0 %v398
    %416 = vmatprep.subr.bf16.mxu0 0
    %417 = vmatpush1.bf16.msra.mxu0 %v399
    %418 = vmatprep.subr.bf16.mxu0 0
    %419 = vmatpush1.bf16.msra.mxu0 %v400
    %420 = vmatprep.subr.bf16.mxu0 0
    %421 = vmatpush1.bf16.msra.mxu0 %v410
    %422 = vmatprep.subr.bf16.mxu0 0
    %423 = vmatpush1.bf16.msra.mxu0 0
    %424 = vmatprep.subr.bf16.mxu0 0
    %425 = vmatpush1.bf16.msra.mxu0 0
    %426 = vmatprep.subr.bf16.mxu0 0
    %427 = vmatpush1.bf16.msra.mxu0 0
    %428 = vmatprep.subr.bf16.mxu0 0
    %429 = vmatpush1.bf16.msra.mxu0 0
    %430 = vmatprep.subr.bf16.mxu0 0
    %431 = vmatpush1.bf16.msra.mxu0 0
    %432 = vmatprep.subr.bf16.mxu0 0
    %433 = vmatpush1.bf16.msra.mxu0 0
    %434 = vmatprep.subr.bf16.mxu0 0
    %435 = vmatpush1.bf16.msra.mxu0 0
    %436 = vmatprep.subr.bf16.mxu0 0
    %437 = vmatpush1.bf16.msra.mxu0 0
    %438 = vmatprep.subr.bf16.mxu0 0
    %439 = vmatpush1.bf16.msra.mxu0 0
    %440 = vmatprep.subr.bf16.mxu0 0
    %441 = vmatpush1.bf16.msra.mxu0 0
    %442 = vmatprep.subr.bf16.mxu0 0
    %443 = vmatpush1.bf16.msra.mxu0 0
    %444 = vmatprep.mubr.bf16.mxu0 0
    %445 = vmatmul.mubr.bf16.gmra.mrb[0].mxu0 %v407
    %v446 = vpop.f32.mrb[0].mxu0
    %v447 = vadd.f32 0.0, %v446
    %v448 = vpop.f32.mrb[0].mxu0
    %v449 = vpop.f32.mrb[0].mxu0
    %v450 = vadd.f32 0.0, %v449
    %v451 = vpop.f32.mrb[0].mxu0
    %452 = vdwg.mxu0
    %v462 = vunpack.c.l.b16 %v340
    %v463 = vunpack.c.l.b16 %v341
    %v464 = vunpack.c.l.b16 %v342
    %v465 = vunpack.c.l.b16 %v343
    %v466 = vunpack.c.l.b16 %v344
    %v467 = vunpack.c.l.b16 %v345
    %v468 = vunpack.c.l.b16 %v346
    %v469 = vunpack.c.l.b16 %v347
    %v470 = vunpack.c.l.b16 %v348
    %v471 = vpack.c.b16 %v463, %v462
    %v472 = vpack.c.b16 %v465, %v464
    %v473 = vpack.c.b16 %v467, %v466
    %v474 = vpack.c.b16 %v469, %v468
    %v475 = vpack.c.b16 %v470, %v470
    %v480 = vsel %vm101, %v365, 0
    %v483 = vsel %vm105, %v475, 0
    %485 = vmatprep.subr.bf16.mxu0 0
    %486 = vmatpush1.bf16.msra.mxu0 %v471
    %487 = vmatprep.subr.bf16.mxu0 0
    %488 = vmatpush1.bf16.msra.mxu0 %v472
    %489 = vmatprep.subr.bf16.mxu0 0
    %490 = vmatpush1.bf16.msra.mxu0 %v473
    %491 = vmatprep.subr.bf16.mxu0 0
    %492 = vmatpush1.bf16.msra.mxu0 %v474
    %493 = vmatprep.subr.bf16.mxu0 0
    %494 = vmatpush1.bf16.msra.mxu0 %v483
    %495 = vmatprep.subr.bf16.mxu0 0
    %496 = vmatpush1.bf16.msra.mxu0 0
    %497 = vmatprep.subr.bf16.mxu0 0
    %498 = vmatpush1.bf16.msra.mxu0 0
    %499 = vmatprep.subr.bf16.mxu0 0
    %500 = vmatpush1.bf16.msra.mxu0 0
    %501 = vmatprep.subr.bf16.mxu0 0
    %502 = vmatpush1.bf16.msra.mxu0 0
    %503 = vmatprep.subr.bf16.mxu0 0
    %504 = vmatpush1.bf16.msra.mxu0 0
    %505 = vmatprep.subr.bf16.mxu0 0
    %506 = vmatpush1.bf16.msra.mxu0 0
    %507 = vmatprep.subr.bf16.mxu0 0
    %508 = vmatpush1.bf16.msra.mxu0 0
    %509 = vmatprep.subr.bf16.mxu0 0
    %510 = vmatpush1.bf16.msra.mxu0 0
    %511 = vmatprep.subr.bf16.mxu0 0
    %512 = vmatpush1.bf16.msra.mxu0 0
    %513 = vmatprep.subr.bf16.mxu0 0
    %514 = vmatpush1.bf16.msra.mxu0 0
    %515 = vmatprep.subr.bf16.mxu0 0
    %516 = vmatpush1.bf16.msra.mxu0 0
    %517 = vmatprep.mubr.bf16.mxu0 0
    %518 = vmatmul.mubr.bf16.gmra.mrb[0].mxu0 %v480
    %v519 = vpop.f32.mrb[0].mxu0
    %v520 = vadd.f32 %v447, %v519
    %v521 = vpop.f32.mrb[0].mxu0
    %v522 = vpop.f32.mrb[0].mxu0
    %v523 = vadd.f32 %v450, %v522
    %v524 = vpop.f32.mrb[0].mxu0
    %525 = vdwg.mxu0
    %v526 = vld [vmem:[%s337] sm:$0xe]
    %v527 = vld [vmem:[%s224] sm:$0xf]
    %v528 = vld [vmem:[%s224 + $0x4] sm:$0xf]
    %v529 = vld [vmem:[%s224 + $0x8] sm:$0xf]
    %v530 = vld [vmem:[%s224 + $0xc] sm:$0xf]
    %v531 = vld [vmem:[%s224 + $0x10] sm:$0xf]
    %v532 = vld [vmem:[%s224 + $0x14] sm:$0xf]
    %v533 = vld [vmem:[%s224 + $0x18] sm:$0xf]
    %v534 = vld [vmem:[%s224 + $0x1c] sm:$0xf]
    %v535 = vld [vmem:[%s224 + $0x20] sm:$0xf]
    %v537 = vunpack.c.l.b16 %v526
    %v538 = vpack.c.b16 %v363, %v537
    %v539 = vrot.slane %v538, 1
    %v540 = vrot.slane %v366, 1
    %v541 = vsel %vm237, %v539, %v540
    %v551 = vunpack.c.l.b16 %v527
    %v552 = vunpack.c.l.b16 %v528
    %v553 = vunpack.c.l.b16 %v529
    %v554 = vunpack.c.l.b16 %v530
    %v555 = vunpack.c.l.b16 %v531
    %v556 = vunpack.c.l.b16 %v532
    %v557 = vunpack.c.l.b16 %v533
    %v558 = vunpack.c.l.b16 %v534
    %v559 = vunpack.c.l.b16 %v535
    %v560 = vpack.c.b16 %v552, %v551
    %v561 = vpack.c.b16 %v554, %v553
    %v562 = vpack.c.b16 %v556, %v555
    %v563 = vpack.c.b16 %v558, %v557
    %v564 = vpack.c.b16 %v559, %v559
    %v570 = vsel %vm101, %v541, 0
    %v573 = vsel %vm105, %v564, 0
    %575 = vmatprep.subr.bf16.mxu0 0
    %576 = vmatpush1.bf16.msra.mxu0 %v560
    %577 = vmatprep.subr.bf16.mxu0 0
    %578 = vmatpush1.bf16.msra.mxu0 %v561
    %579 = vmatprep.subr.bf16.mxu0 0
    %580 = vmatpush1.bf16.msra.mxu0 %v562
    %581 = vmatprep.subr.bf16.mxu0 0
    %582 = vmatpush1.bf16.msra.mxu0 %v563
    %583 = vmatprep.subr.bf16.mxu0 0
    %584 = vmatpush1.bf16.msra.mxu0 %v573
    %585 = vmatprep.subr.bf16.mxu0 0
    %586 = vmatpush1.bf16.msra.mxu0 0
    %587 = vmatprep.subr.bf16.mxu0 0
    %588 = vmatpush1.bf16.msra.mxu0 0
    %589 = vmatprep.subr.bf16.mxu0 0
    %590 = vmatpush1.bf16.msra.mxu0 0
    %591 = vmatprep.subr.bf16.mxu0 0
    %592 = vmatpush1.bf16.msra.mxu0 0
    %593 = vmatprep.subr.bf16.mxu0 0
    %594 = vmatpush1.bf16.msra.mxu0 0
    %595 = vmatprep.subr.bf16.mxu0 0
    %596 = vmatpush1.bf16.msra.mxu0 0
    %597 = vmatprep.subr.bf16.mxu0 0
    %598 = vmatpush1.bf16.msra.mxu0 0
    %599 = vmatprep.subr.bf16.mxu0 0
    %600 = vmatpush1.bf16.msra.mxu0 0
    %601 = vmatprep.subr.bf16.mxu0 0
    %602 = vmatpush1.bf16.msra.mxu0 0
    %603 = vmatprep.subr.bf16.mxu0 0
    %604 = vmatpush1.bf16.msra.mxu0 0
    %605 = vmatprep.subr.bf16.mxu0 0
    %606 = vmatpush1.bf16.msra.mxu0 0
    %607 = vmatprep.mubr.bf16.mxu0 0
    %608 = vmatmul.mubr.bf16.gmra.mrb[0].mxu0 %v570
    %v609 = vpop.f32.mrb[0].mxu0
    %v610 = vadd.f32 0.0, %v609
    %v611 = vpop.f32.mrb[0].mxu0
    %v612 = vpop.f32.mrb[0].mxu0
    %v613 = vadd.f32 0.0, %v612
    %v614 = vpop.f32.mrb[0].mxu0
    %615 = vdwg.mxu0
    %v616 = vadd.f32 %v520, %v610
    %v617 = vadd.f32 %v523, %v613
    %v618 = vadd.f32 %v616, %v321
    %v619 = vadd.f32 %v617, %v321
    %v620 = vmax.f32 %v618, 0.0
    %v621 = vmax.f32 %v619, 0.0
    %v622 = vpack.c.bf16 %v621, %v620
    %v624 = vunpack.c.l.b16 %v622
    %v625 = vunpack.c.h.b16 %v622
    %v626 = vpack.c.b16 %v624, %v624
    %v627 = vpack.c.b16 %v625, %v625
    %s630 = scalar_lea.vmem [#allocation5], 8
    %631 = vst [vmem:[%s630] sm:$0xf] %v626
    %632 = vst [vmem:[%s630 + $0x4] sm:$0xf] %v627
    // Predicated region
    $region18: #{tpu_custom_call.1} parent=1 // pred_check
      _
    $region19: #{tpu_custom_call.1} parent=1 // pred_check_branch
      %634 = sbr.rel (0) target = $region21
    $region20: #{tpu_custom_call.1} parent=1 // pred_region
      %s636 = ssub.s32 256, 256
      %637 = vsyncadd [#allocation4], %s636
      %s638 = sshll.u32 [#allocation5], 4
      %s639 = int_to_ptr.vmem [resolvable:$true] %s638
      %644 = dma.vmem_to_hbm [thread:$0]  %s639, 256, %s3, [#allocation4], 64, 64, 4
    $region21: #{tpu_custom_call.1} parent=1 // pred_fallthru
      _
    // Predicated region
    $region22: #{tpu_custom_call.1} parent=1 // pred_check
      _
    $region23: #{tpu_custom_call.1} parent=1 // pred_check_branch
      %646 = sbr.rel (0) target = $region25
    $region24: #{tpu_custom_call.1} parent=1 // pred_region
      %647 = dma.done [#allocation4], 256
    $region25: #{tpu_custom_call.1} parent=1 // pred_fallthru
      _
    %648 = vsyncpa [#allocation3], 1
    %649 = vsyncpa [#allocation4], 1

</llo_original>
